<compile_context>
chip_gen: v6e
topology: v6e:2x2x1
jax: 0.10.0
libtpu: 0.0.40
codegen_flags: <defaults>
</compile_context>

<pallas_src>
import jax
import jax.numpy as jnp
from jax.experimental import pallas as pl
from jax.experimental.pallas import tpu as pltpu

_LANE = 128
_SUBLANE = 8
_FAST_PATH_BYTES = 1 << 20      # below this: pure jnp, let XLA fuse into consumer
_TARGET_TILE_BYTES = 2 << 20    # ~2 MiB output tile: near roofline, VMEM-safe on
                                # v5e (16 MiB scoped) / v6e / v7x (32 MiB scoped)


def _round_up(x, m):
    return (x + m - 1) // m * m


def _ace_shift_kernel(shift_ref, mean_ref, hd_ref, o_ref):
    # shift_ref: (tb, 1)   per-row shift
    # mean_ref : (1, te)   0.5 * (pv0 + pv1)
    # hd_ref   : (1, te)   0.5 * (pv0 - pv1)
    # o_ref    : (tb, te)  mean + shift * half_diff   (VPU broadcast FMA only)
    fma = mean_ref[...] + shift_ref[...] * hd_ref[...]
    o_ref[...] = fma.astype(o_ref.dtype)


def _pick_tiles(B, E, itemsize):
    """Pick (tb, te) so one output tile is ~_TARGET_TILE_BYTES and legal."""
    sub = max(_SUBLANE, 32 // itemsize)       # 8 for f32, 16 for bf16, 32 for i8
    row_bytes = max(E * itemsize, 1)
    tb = _TARGET_TILE_BYTES // row_bytes
    tb = max(sub, (tb // sub) * sub)          # multiple of the sublane packing
    if tb >= B:
        # A single batch tile covers everything (full-dim block is always legal).
        tb = B
        if E >= 2 * _LANE:
            # Split the lane axis so the grid exposes >= 2 independent tiles
            # (keeps both v7x TensorCores busy; no-op cost on v5e/v6e) while
            # keeping each tile near the byte target. te is a multiple of 128,
            # so a ragged tail block just gets masked stores.
            ne = max(2, pl.cdiv(B * row_bytes, _TARGET_TILE_BYTES))
            te = max(_LANE, _round_up(pl.cdiv(E, ne), _LANE))
        else:
            te = E                            # full-dim lane block
    else:
        te = E                                # tile batch only; full-dim lanes
    return tb, te


def ace_forward_shift(shift, mean, half_diff, *, out_dtype=jnp.float32,
                      force_pallas=False):
    """shift: (B, 1) f32; mean/half_diff: (E,) f32 -> (B, E) out_dtype."""
    B = shift.shape[0]
    E = mean.shape[0]
    itemsize = jnp.dtype(out_dtype).itemsize

    if not force_pallas and B * E * itemsize < _FAST_PATH_BYTES:
        # Tiny output: the custom-call boundary + ~0.35 us/grid-step overhead
        # would dominate a single broadcast-FMA; emit plain jnp so XLA fuses it.
        return (mean[None, :] + shift * half_diff[None, :]).astype(out_dtype)

    tb, te = _pick_tiles(B, E, itemsize)
    grid = (pl.cdiv(B, tb), pl.cdiv(E, te))

    return pl.pallas_call(
        _ace_shift_kernel,
        out_shape=jax.ShapeDtypeStruct((B, E), out_dtype),
        grid=grid,
        in_specs=[
            pl.BlockSpec((tb, 1), lambda i, j: (i, 0)),
            pl.BlockSpec((1, te), lambda i, j: (0, j)),
            pl.BlockSpec((1, te), lambda i, j: (0, j)),
        ],
        out_specs=pl.BlockSpec((tb, te), lambda i, j: (i, j)),
        compiler_params=pltpu.CompilerParams(
            # Every (i, j) tile is independent: shards across both TensorCores
            # on v7x, no-op on v5e/v6e.
            dimension_semantics=("parallel", "parallel"),
        ),
    )(mean.reshape(1, E), half_diff.reshape(1, E))[1] if False else pl.pallas_call(
        _ace_shift_kernel,
        out_shape=jax.ShapeDtypeStruct((B, E), out_dtype),
        grid=grid,
        in_specs=[
            pl.BlockSpec((tb, 1), lambda i, j: (i, 0)),
            pl.BlockSpec((1, te), lambda i, j: (0, j)),
            pl.BlockSpec((1, te), lambda i, j: (0, j)),
        ],
        out_specs=pl.BlockSpec((tb, te), lambda i, j: (i, j)),
        compiler_params=pltpu.CompilerParams(
            dimension_semantics=("parallel", "parallel"),
        ),
    )(shift, mean.reshape(1, E), half_diff.reshape(1, E))


class AdjustableClassEmbedding:
    """JAX/Pallas port of the PyTorch AdjustableClassEmbedding module."""

    def __init__(self, embed_dim, key, out_dtype=jnp.float32):
        # TODO(synk): torch trunc_normal_ resamples inside +/-2 in value space;
        # with std=0.02 a clip is statistically indistinguishable.
        pv = jnp.clip(
            jax.random.normal(key, (1, 2, embed_dim), jnp.float32) * 0.02, -2.0, 2.0
        )
        self.parameter_vectors = pv          # (1, 2, E), kept for reference parity
        self.embed_dim = embed_dim
        self.out_dtype = out_dtype
        # Precompute the two FMA operands once (pure functions of the params).
        self._mean = 0.5 * (pv[0, 0] + pv[0, 1])        # (E,)
        self._half_diff = 0.5 * (pv[0, 0] - pv[0, 1])   # (E,)

    def __call__(self, shift=None, force_pallas=False):
        if shift is None:
            # No kernel launch: the mean is a fixed function of the parameters.
            return self._mean.reshape(1, 1, self.embed_dim).astype(self.out_dtype)
        shift = jnp.asarray(shift, jnp.float32)          # single cast
        if shift.ndim == 1:
            shift = shift[:, None]
        if shift.ndim != 2 or shift.shape[1] != 1:
            raise ValueError(f"shift must be (B,) or (B, 1), got {shift.shape}")
        out = ace_forward_shift(
            shift, self._mean, self._half_diff,
            out_dtype=self.out_dtype, force_pallas=force_pallas,
        )                                                # (B, E)
        return out[:, None, :]                           # (B, 1, E)


def _reference(pv, shift):
    """Pure-JAX reference for correctness checking."""
    if shift is None:
        return jnp.mean(pv, axis=1, keepdims=True)
    s_ = jnp.concatenate([(1.0 + shift) / 2.0, (1.0 - shift) / 2.0], axis=-1)
    return jnp.einsum("be,nec->bnc", s_, pv)


if __name__ == "__main__":
    key = jax.random.PRNGKey(0)
    k_param, k_shift, k_param2, k_shift2 = jax.random.split(key, 4)

    # --- Small shape (B=2, E=32) -------------------------------------------
    embed_dim, batch = 32, 2
    ace = AdjustableClassEmbedding(embed_dim, k_param)
    shift = jax.random.uniform(k_shift, (batch, 1), jnp.float32, -1.0, 1.0)
    ref_shift = _reference(ace.parameter_vectors, shift)

    # Fast path (pure jnp, fuses into consumer).
    out_fast = jax.block_until_ready(ace(shift))
    assert out_fast.shape == (batch, 1, embed_dim), out_fast.shape
    assert jnp.allclose(out_fast, ref_shift, atol=1e-5, rtol=1e-5)

    # Pallas kernel path, forced so the kernel itself runs at this small shape.
    out_pallas = jax.block_until_ready(ace(shift, force_pallas=True))
    assert out_pallas.shape == (batch, 1, embed_dim), out_pallas.shape
    assert jnp.allclose(out_pallas, ref_shift, atol=1e-5, rtol=1e-5)

    # shift=None -> cached mean, no kernel launch.
    out_mean = jax.block_until_ready(ace(None))
    ref_mean = _reference(ace.parameter_vectors, None)
    assert out_mean.shape == (1, 1, embed_dim), out_mean.shape
    assert jnp.allclose(out_mean, ref_mean, atol=1e-5, rtol=1e-5)

    # --- Slightly larger shape exercising the multi-tile (lane-split) grid ---
    embed_dim2, batch2 = 256, 128
    ace2 = AdjustableClassEmbedding(embed_dim2, k_param2)
    shift2 = jax.random.uniform(k_shift2, (batch2, 1), jnp.float32, -1.0, 1.0)
    out2 = jax.block_until_ready(ace2(shift2, force_pallas=True))
    ref2 = _reference(ace2.parameter_vectors, shift2)
    assert out2.shape == (batch2, 1, embed_dim2), out2.shape
    assert jnp.allclose(out2, ref2, atol=1e-5, rtol=1e-5)

    print("KERNEL_OK")
</pallas_src>

<mosaic_0001>
module attributes {stable_mosaic.version = 11 : i64} {
  func.func @_ace_shift_kernel(%arg0: i32, %arg1: i32, %arg2: memref<2x1xf32, #tpu.memory_space<vmem>>, %arg3: memref<1x32xf32, #tpu.memory_space<vmem>>, %arg4: memref<1x32xf32, #tpu.memory_space<vmem>>, %arg5: memref<2x32xf32, #tpu.memory_space<vmem>>) attributes {dimension_semantics = [#tpu.dimension_semantics<parallel>, #tpu.dimension_semantics<parallel>], iteration_bounds = array<i64: 1, 1>, scalar_prefetch = 0 : i64, scratch_operands = 0 : i64, tpu.core_type = #tpu.core_type<tc>, window_params = [{transform_indices = @transform_0, window_bounds = array<i64: 2, 1>}, {transform_indices = @transform_1, window_bounds = array<i64: 1, 32>}, {transform_indices = @transform_2, window_bounds = array<i64: 1, 32>}, {transform_indices = @transform_3, window_bounds = array<i64: 2, 32>}]} {
    %c0 = arith.constant 0 : index
    %c0_0 = arith.constant 0 : index
    %0 = vector.load %arg3[%c0, %c0_0] : memref<1x32xf32, #tpu.memory_space<vmem>>, vector<1x32xf32>
    %c0_1 = arith.constant 0 : index
    %c0_2 = arith.constant 0 : index
    %1 = vector.load %arg2[%c0_1, %c0_2] : memref<2x1xf32, #tpu.memory_space<vmem>>, vector<2x1xf32>
    %c0_3 = arith.constant 0 : index
    %c0_4 = arith.constant 0 : index
    %2 = vector.load %arg4[%c0_3, %c0_4] : memref<1x32xf32, #tpu.memory_space<vmem>>, vector<1x32xf32>
    %3 = vector.broadcast %1 : vector<2x1xf32> to vector<2x32xf32>
    %4 = vector.broadcast %2 : vector<1x32xf32> to vector<2x32xf32>
    %5 = arith.mulf %3, %4 : vector<2x32xf32>
    %6 = vector.broadcast %0 : vector<1x32xf32> to vector<2x32xf32>
    %7 = arith.addf %6, %5 : vector<2x32xf32>
    %c0_5 = arith.constant 0 : index
    %c0_6 = arith.constant 0 : index
    %8 = vector.load %arg5[%c0_5, %c0_6] : memref<2x32xf32, #tpu.memory_space<vmem>>, vector<2x32xf32>
    tpu.vector_store %arg5[%c0_5, %c0_6], %7 {strides = array<i32>} : memref<2x32xf32, #tpu.memory_space<vmem>>, vector<2x32xf32>,
    return
  }
  func.func @transform_0(%arg0: i32, %arg1: i32) -> (i32, i32) {
    %c0_i32 = arith.constant 0 : i32
    %c0_i32_0 = arith.constant 0 : i32
    return %arg0, %c0_i32 : i32, i32
  }
  func.func @transform_1(%arg0: i32, %arg1: i32) -> (i32, i32) {
    %c0_i32 = arith.constant 0 : i32
    %c0_i32_0 = arith.constant 0 : i32
    return %c0_i32, %arg1 : i32, i32
  }
  func.func @transform_2(%arg0: i32, %arg1: i32) -> (i32, i32) {
    %c0_i32 = arith.constant 0 : i32
    %c0_i32_0 = arith.constant 0 : i32
    return %c0_i32, %arg1 : i32, i32
  }
  func.func @transform_3(%arg0: i32, %arg1: i32) -> (i32, i32) {
    %c0_i32 = arith.constant 0 : i32
    return %arg0, %arg1 : i32, i32
  }
}

</mosaic_0001>

<llo_original>
// kernel: tpu_custom_call.1
$region0: #{tpu_custom_call.1}
  #allocation0 [shape = 'u32[]', space=smem, size = 0x4, offset = 0x4, fixed_abs, tag = 'smem constant byte address 0x4 - core index']
  #allocation1 [shape = 'u32[144,128]{1,0:T(1,128)}', space=vmem, size = 0x12000, scoped, tag = 'internal scratch']
  %s0 = inlined_call_operand.vmem [shape: f32[2,1], index: 0, kind: input, shape index: {}]
  %s1 = inlined_call_operand.vmem [shape: f32[1,32], index: 1, kind: input, shape index: {}]
  %s2 = inlined_call_operand.vmem [shape: f32[1,32], index: 2, kind: input, shape index: {}]
  %s3 = inlined_call_operand.hbm [shape: f32[2,32], index: 3, kind: output, shape index: {}]
  %s4 = sld [smem:[#allocation0]]
  $region22: #{tpu_custom_call.1} parent=0
    _
  %s6 = ssub.s32 1, %s4
  %s7 = scalar_select 0, %s6, %s4
  $region1: #{tpu_custom_call.1} parent=0
    #allocation2 [shape = 'u8[1024]{0}', space=vmem, size = 0x400, scoped, tag = 'output window, operand 0, single buffered']
    #allocation3 [shape = 's32[1]{0}', space=sflag, size = 0x4, scoped, tag = 'scoped memory for tpu_custom_call.1']
    %8 = vsyncpa [#allocation3], 0
    // Predicated region
    $region2: #{tpu_custom_call.1} parent=1 // pred_check
      _
    $region3: #{tpu_custom_call.1} parent=1 // pred_check_branch
      %10 = sbr.rel (0) target = $region5
    $region4: #{tpu_custom_call.1} parent=1 // pred_region
      _
    $region5: #{tpu_custom_call.1} parent=1 // pred_fallthru
      _
    // Predicated region
    $region6: #{tpu_custom_call.1} parent=1 // pred_check
      _
    $region7: #{tpu_custom_call.1} parent=1 // pred_check_branch
      %12 = sbr.rel (0) target = $region9
    $region8: #{tpu_custom_call.1} parent=1 // pred_region
      _
    $region9: #{tpu_custom_call.1} parent=1 // pred_fallthru
      _
    // Predicated region
    $region10: #{tpu_custom_call.1} parent=1 // pred_check
      _
    $region11: #{tpu_custom_call.1} parent=1 // pred_check_branch
      %14 = sbr.rel (0) target = $region13
    $region12: #{tpu_custom_call.1} parent=1 // pred_region
      _
    $region13: #{tpu_custom_call.1} parent=1 // pred_fallthru
      _
    %v15 = vld [vmem:[%s1] sm:$0x1]
    %v16 = vld [vmem:[%s0] sm:$0x3]
    %v17 = vld [vmem:[%s2] sm:$0x1]
    %19 = vset.pattern.permute.xlu0 0
    %20 = vperm.xlu0 %19, %v16
    %v21 = vpop.permute.xlu0 %20
    %v24 = vlaneseq
    %v25 = vshrl.u32 %v24, 7
    %v26 = vsub.s32 0, %v25
    %v27 = vrot.slane %v17, %v26
    %v29 = vmul.f32 %v21, %v27
    %v31 = vlaneseq
    %v32 = vshrl.u32 %v31, 7
    %v33 = vsub.s32 0, %v32
    %v34 = vrot.slane %v15, %v33
    %v36 = vadd.f32 %v34, %v29
    %vm37 = vcmask 254976
    %38 = vst.msk [vmem:[#allocation2] sm:$0x3] %vm37, %v36
    // Predicated region
    $region14: #{tpu_custom_call.1} parent=1 // pred_check
      _
    $region15: #{tpu_custom_call.1} parent=1 // pred_check_branch
      %40 = sbr.rel (0) target = $region17
    $region16: #{tpu_custom_call.1} parent=1 // pred_region
      %s42 = ssub.s32 32, 32
      %43 = vsyncadd [#allocation3], %s42
      %s45 = sshll.u32 [#allocation2], 4
      %s46 = int_to_ptr.vmem [resolvable:$true] %s45
      %48 = dma.vmem_to_hbm [thread:$0]  %s46, 32, %s3, [#allocation3]
    $region17: #{tpu_custom_call.1} parent=1 // pred_fallthru
      _
    // Predicated region
    $region18: #{tpu_custom_call.1} parent=1 // pred_check
      _
    $region19: #{tpu_custom_call.1} parent=1 // pred_check_branch
      %50 = sbr.rel (0) target = $region21
    $region20: #{tpu_custom_call.1} parent=1 // pred_region
      %51 = dma.done [#allocation3], 32
    $region21: #{tpu_custom_call.1} parent=1 // pred_fallthru
      _
    %52 = vsyncpa [#allocation3], 1

</llo_original>
